<compile_context>
chip_gen: v7x
topology: tpu7x:2x2x1
jax: 0.10.0
libtpu: 0.0.40
codegen_flags: <defaults>
</compile_context>

<pallas_src>
import jax
import jax.numpy as jnp
from jax.experimental import pallas as pl
from jax.experimental.pallas import tpu as pltpu

NUM_EMB = 4   # embedding vocab
EMB_DIM = 2   # embedding dim
X_DIM = 2     # x feature dim (X_DIM + EMB_DIM = 4 = fc1 in_features)
H_DIM = 4     # fc1 out_features
OUT_DIM = 2   # fc2 out_features

# Packed-parameter layout (flattened (8, 8) -> 64 f32 in SMEM):
#   row h   (h in [0,4)):  [W1[h,0], W1[h,1], T_fm[h,0..3], b1[h], 0]
#   row 4+o (o in [0,2)):  [W2[o,0..3], 0, 0, 0, 0]
P_ROWS, P_COLS = 8, 8
BIAS_COL = X_DIM + NUM_EMB


def recursive_kernel(p_ref, xin_ref, out_ref):
    # p_ref:   (64,)          f32  SMEM  packed params (scalar reads)
    # xin_ref: (3, TB)        f32  VMEM  rows 0..1 = x features, row 2 = sid (as f32)
    # out_ref: (OUT_DIM, TB)  f32  VMEM  feature-major output (lane-dense)
    x_rows = [xin_ref[pl.ds(f, 1), :] for f in range(X_DIM)]        # each (1, TB)
    sid = xin_ref[pl.ds(X_DIM, 1), :]                               # (1, TB) f32

    # One-hot indicator rows (pure VPU compares); shared by all hidden rows.
    onehot = [(sid == float(n)).astype(jnp.float32) for n in range(NUM_EMB)]

    # fc1 + folded embedding + bias + relu, one hidden row at a time (VPU MACs).
    h_rows = []
    for h in range(H_DIM):
        base = h * P_COLS
        acc = x_rows[0] * p_ref[base + 0]
        for f in range(1, X_DIM):
            acc = acc + x_rows[f] * p_ref[base + f]
        for n in range(NUM_EMB):
            acc = acc + onehot[n] * p_ref[base + X_DIM + n]
        acc = acc + p_ref[base + BIAS_COL]
        h_rows.append(jnp.maximum(acc, 0.0))                        # relu

    # fc2 (no bias): out[o, :] = sum_h W2[o, h] * h_rows[h]
    for o in range(OUT_DIM):
        base = (H_DIM + o) * P_COLS
        row = h_rows[0] * p_ref[base + 0]
        for h in range(1, H_DIM):
            row = row + h_rows[h] * p_ref[base + h]
        out_ref[pl.ds(o, 1), :] = row                               # full-lane store


def recursive_forward(x, sid, params):
    emb, w1, b1, w2 = params["emb"], params["w1"], params["b1"], params["w2"]
    B = x.shape[0]

    # Lane-align the batch and pick a lane-column tile (>=128, <=8192).
    b_pad = ((B + 127) // 128) * 128
    tile_b = min(8192, b_pad)
    b_pad = ((b_pad + tile_b - 1) // tile_b) * tile_b
    grid = (b_pad // tile_b,)

    # Single feature-major, zero-padded input slab: rows 0..1 = x.T, row 2 = sid.
    xin = jnp.zeros((X_DIM + 1, b_pad), jnp.float32)
    xin = xin.at[:X_DIM, :B].set(x.astype(jnp.float32).T)
    xin = xin.at[X_DIM, :B].set(sid.astype(jnp.float32))

    # Fold the embedding into fc1 and pack every parameter into one flat SMEM array.
    t_fm = w1[:, X_DIM:] @ emb.T                         # (H_DIM, NUM_EMB)
    p2 = jnp.zeros((P_ROWS, P_COLS), jnp.float32)
    p2 = p2.at[:H_DIM, :X_DIM].set(w1[:, :X_DIM])
    p2 = p2.at[:H_DIM, X_DIM:X_DIM + NUM_EMB].set(t_fm)
    p2 = p2.at[:H_DIM, BIAS_COL].set(b1)
    p2 = p2.at[H_DIM:H_DIM + OUT_DIM, :H_DIM].set(w2)
    p = p2.reshape(-1)                                   # (64,) -> 256 B SMEM

    out_fm = pl.pallas_call(
        recursive_kernel,
        out_shape=jax.ShapeDtypeStruct((OUT_DIM, b_pad), jnp.float32),
        grid=grid,
        in_specs=[
            pl.BlockSpec(memory_space=pltpu.MemorySpace.SMEM),       # packed params
            pl.BlockSpec((X_DIM + 1, tile_b), lambda i: (0, i)),     # x + sid slab
        ],
        out_specs=pl.BlockSpec((OUT_DIM, tile_b), lambda i: (0, i)),
        compiler_params=pltpu.CompilerParams(
            dimension_semantics=("parallel",),          # v7x: shard batch over 2 TCs
            vmem_limit_bytes=32 * 1024 * 1024),         # tiles are KiB-scale; safe on v5e/v6e/v7x
    )(p, xin)

    # Back to the PyTorch (B, OUT_DIM) convention (wrapper-side layout plumbing).
    return out_fm[:, :B].T


def init_params(key):
    k1, k2, k3, k4 = jax.random.split(key, 4)
    bound1 = 1.0 / jnp.sqrt(4.0)
    w1 = jax.random.uniform(k1, (H_DIM, X_DIM + EMB_DIM), jnp.float32,
                            -bound1, bound1)
    b1 = jax.random.uniform(k2, (H_DIM,), jnp.float32, -bound1, bound1)
    w2 = jax.random.uniform(k3, (OUT_DIM, H_DIM), jnp.float32, -bound1, bound1)
    emb = jax.random.normal(k4, (NUM_EMB, EMB_DIM), jnp.float32)
    return {"emb": emb, "w1": w1, "b1": b1, "w2": w2}


def reference_forward(x, sid, params):
    e = params["emb"][sid]                               # (B, EMB_DIM)
    h = jnp.concatenate([x, e], axis=-1)                 # (B, 4)
    h = h @ params["w1"].T + params["b1"]
    h = jnp.maximum(h, 0.0)
    return h @ params["w2"].T


if __name__ == "__main__":
    key = jax.random.PRNGKey(0)
    kx, ks, kp = jax.random.split(key, 3)

    B = 8
    x = jax.random.normal(kx, (B, X_DIM), jnp.float32)
    sid = jax.random.randint(ks, (B,), 0, NUM_EMB, jnp.int32)
    params = init_params(kp)

    out = recursive_forward(x, sid, params)
    out = jax.block_until_ready(out)

    ref = reference_forward(x, sid, params)
    assert out.shape == (B, OUT_DIM)
    assert jnp.allclose(out, ref, atol=1e-5, rtol=1e-5)
    print("KERNEL_OK")
</pallas_src>

<mosaic_0001>
module attributes {stable_mosaic.version = 11 : i64} {
  func.func @recursive_kernel(%arg0: i32, %arg1: memref<64xf32, #tpu.memory_space<smem>>, %arg2: memref<3x128xf32, #tpu.memory_space<vmem>>, %arg3: memref<2x128xf32, #tpu.memory_space<vmem>>) attributes {dimension_semantics = [#tpu.dimension_semantics<parallel>], iteration_bounds = array<i64: 1>, scalar_prefetch = 0 : i64, scratch_operands = 0 : i64, tpu.core_type = #tpu.core_type<tc>, window_params = [{transform_indices = @transform_0, window_bounds = array<i64: 64>}, {transform_indices = @transform_1, window_bounds = array<i64: 3, 128>}, {transform_indices = @transform_2, window_bounds = array<i64: 2, 128>}]} {
    %c0 = arith.constant 0 : index
    %c0_0 = arith.constant 0 : index
    %0 = vector.load %arg2[%c0, %c0_0] : memref<3x128xf32, #tpu.memory_space<vmem>>, vector<1x128xf32>
    %c1 = arith.constant 1 : index
    %c0_1 = arith.constant 0 : index
    %1 = vector.load %arg2[%c1, %c0_1] : memref<3x128xf32, #tpu.memory_space<vmem>>, vector<1x128xf32>
    %c2 = arith.constant 2 : index
    %c0_2 = arith.constant 0 : index
    %2 = vector.load %arg2[%c2, %c0_2] : memref<3x128xf32, #tpu.memory_space<vmem>>, vector<1x128xf32>
    %cst = arith.constant 0.000000e+00 : f32
    %3 = vector.broadcast %cst : f32 to vector<1x128xf32>
    %4 = arith.cmpf oeq, %2, %3 : vector<1x128xf32>
    %5 = arith.extui %4 : vector<1x128xi1> to vector<1x128xi32>
    %6 = arith.sitofp %5 : vector<1x128xi32> to vector<1x128xf32>
    %cst_3 = arith.constant 1.000000e+00 : f32
    %7 = vector.broadcast %cst_3 : f32 to vector<1x128xf32>
    %8 = arith.cmpf oeq, %2, %7 : vector<1x128xf32>
    %9 = arith.extui %8 : vector<1x128xi1> to vector<1x128xi32>
    %10 = arith.sitofp %9 : vector<1x128xi32> to vector<1x128xf32>
    %cst_4 = arith.constant 2.000000e+00 : f32
    %11 = vector.broadcast %cst_4 : f32 to vector<1x128xf32>
    %12 = arith.cmpf oeq, %2, %11 : vector<1x128xf32>
    %13 = arith.extui %12 : vector<1x128xi1> to vector<1x128xi32>
    %14 = arith.sitofp %13 : vector<1x128xi32> to vector<1x128xf32>
    %cst_5 = arith.constant 3.000000e+00 : f32
    %15 = vector.broadcast %cst_5 : f32 to vector<1x128xf32>
    %16 = arith.cmpf oeq, %2, %15 : vector<1x128xf32>
    %17 = arith.extui %16 : vector<1x128xi1> to vector<1x128xi32>
    %18 = arith.sitofp %17 : vector<1x128xi32> to vector<1x128xf32>
    %c0_6 = arith.constant 0 : index
    %19 = memref.load %arg1[%c0_6] : memref<64xf32, #tpu.memory_space<smem>>
    %20 = vector.broadcast %19 : f32 to vector<1x128xf32>
    %21 = arith.mulf %0, %20 : vector<1x128xf32>
    %c1_7 = arith.constant 1 : index
    %22 = memref.load %arg1[%c1_7] : memref<64xf32, #tpu.memory_space<smem>>
    %23 = vector.broadcast %22 : f32 to vector<1x128xf32>
    %24 = arith.mulf %1, %23 : vector<1x128xf32>
    %25 = arith.addf %21, %24 : vector<1x128xf32>
    %c2_8 = arith.constant 2 : index
    %26 = memref.load %arg1[%c2_8] : memref<64xf32, #tpu.memory_space<smem>>
    %27 = vector.broadcast %26 : f32 to vector<1x128xf32>
    %28 = arith.mulf %6, %27 : vector<1x128xf32>
    %29 = arith.addf %25, %28 : vector<1x128xf32>
    %c3 = arith.constant 3 : index
    %30 = memref.load %arg1[%c3] : memref<64xf32, #tpu.memory_space<smem>>
    %31 = vector.broadcast %30 : f32 to vector<1x128xf32>
    %32 = arith.mulf %10, %31 : vector<1x128xf32>
    %33 = arith.addf %29, %32 : vector<1x128xf32>
    %c4 = arith.constant 4 : index
    %34 = memref.load %arg1[%c4] : memref<64xf32, #tpu.memory_space<smem>>
    %35 = vector.broadcast %34 : f32 to vector<1x128xf32>
    %36 = arith.mulf %14, %35 : vector<1x128xf32>
    %37 = arith.addf %33, %36 : vector<1x128xf32>
    %c5 = arith.constant 5 : index
    %38 = memref.load %arg1[%c5] : memref<64xf32, #tpu.memory_space<smem>>
    %39 = vector.broadcast %38 : f32 to vector<1x128xf32>
    %40 = arith.mulf %18, %39 : vector<1x128xf32>
    %41 = arith.addf %37, %40 : vector<1x128xf32>
    %c6 = arith.constant 6 : index
    %42 = memref.load %arg1[%c6] : memref<64xf32, #tpu.memory_space<smem>>
    %43 = vector.broadcast %42 : f32 to vector<1x128xf32>
    %44 = arith.addf %41, %43 : vector<1x128xf32>
    %cst_9 = arith.constant 0.000000e+00 : f32
    %45 = vector.broadcast %cst_9 : f32 to vector<1x128xf32>
    %46 = arith.maximumf %44, %45 : vector<1x128xf32>
    %c8 = arith.constant 8 : index
    %47 = memref.load %arg1[%c8] : memref<64xf32, #tpu.memory_space<smem>>
    %48 = vector.broadcast %47 : f32 to vector<1x128xf32>
    %49 = arith.mulf %0, %48 : vector<1x128xf32>
    %c9 = arith.constant 9 : index
    %50 = memref.load %arg1[%c9] : memref<64xf32, #tpu.memory_space<smem>>
    %51 = vector.broadcast %50 : f32 to vector<1x128xf32>
    %52 = arith.mulf %1, %51 : vector<1x128xf32>
    %53 = arith.addf %49, %52 : vector<1x128xf32>
    %c10 = arith.constant 10 : index
    %54 = memref.load %arg1[%c10] : memref<64xf32, #tpu.memory_space<smem>>
    %55 = vector.broadcast %54 : f32 to vector<1x128xf32>
    %56 = arith.mulf %6, %55 : vector<1x128xf32>
    %57 = arith.addf %53, %56 : vector<1x128xf32>
    %c11 = arith.constant 11 : index
    %58 = memref.load %arg1[%c11] : memref<64xf32, #tpu.memory_space<smem>>
    %59 = vector.broadcast %58 : f32 to vector<1x128xf32>
    %60 = arith.mulf %10, %59 : vector<1x128xf32>
    %61 = arith.addf %57, %60 : vector<1x128xf32>
    %c12 = arith.constant 12 : index
    %62 = memref.load %arg1[%c12] : memref<64xf32, #tpu.memory_space<smem>>
    %63 = vector.broadcast %62 : f32 to vector<1x128xf32>
    %64 = arith.mulf %14, %63 : vector<1x128xf32>
    %65 = arith.addf %61, %64 : vector<1x128xf32>
    %c13 = arith.constant 13 : index
    %66 = memref.load %arg1[%c13] : memref<64xf32, #tpu.memory_space<smem>>
    %67 = vector.broadcast %66 : f32 to vector<1x128xf32>
    %68 = arith.mulf %18, %67 : vector<1x128xf32>
    %69 = arith.addf %65, %68 : vector<1x128xf32>
    %c14 = arith.constant 14 : index
    %70 = memref.load %arg1[%c14] : memref<64xf32, #tpu.memory_space<smem>>
    %71 = vector.broadcast %70 : f32 to vector<1x128xf32>
    %72 = arith.addf %69, %71 : vector<1x128xf32>
    %cst_10 = arith.constant 0.000000e+00 : f32
    %73 = vector.broadcast %cst_10 : f32 to vector<1x128xf32>
    %74 = arith.maximumf %72, %73 : vector<1x128xf32>
    %c16 = arith.constant 16 : index
    %75 = memref.load %arg1[%c16] : memref<64xf32, #tpu.memory_space<smem>>
    %76 = vector.broadcast %75 : f32 to vector<1x128xf32>
    %77 = arith.mulf %0, %76 : vector<1x128xf32>
    %c17 = arith.constant 17 : index
    %78 = memref.load %arg1[%c17] : memref<64xf32, #tpu.memory_space<smem>>
    %79 = vector.broadcast %78 : f32 to vector<1x128xf32>
    %80 = arith.mulf %1, %79 : vector<1x128xf32>
    %81 = arith.addf %77, %80 : vector<1x128xf32>
    %c18 = arith.constant 18 : index
    %82 = memref.load %arg1[%c18] : memref<64xf32, #tpu.memory_space<smem>>
    %83 = vector.broadcast %82 : f32 to vector<1x128xf32>
    %84 = arith.mulf %6, %83 : vector<1x128xf32>
    %85 = arith.addf %81, %84 : vector<1x128xf32>
    %c19 = arith.constant 19 : index
    %86 = memref.load %arg1[%c19] : memref<64xf32, #tpu.memory_space<smem>>
    %87 = vector.broadcast %86 : f32 to vector<1x128xf32>
    %88 = arith.mulf %10, %87 : vector<1x128xf32>
    %89 = arith.addf %85, %88 : vector<1x128xf32>
    %c20 = arith.constant 20 : index
    %90 = memref.load %arg1[%c20] : memref<64xf32, #tpu.memory_space<smem>>
    %91 = vector.broadcast %90 : f32 to vector<1x128xf32>
    %92 = arith.mulf %14, %91 : vector<1x128xf32>
    %93 = arith.addf %89, %92 : vector<1x128xf32>
    %c21 = arith.constant 21 : index
    %94 = memref.load %arg1[%c21] : memref<64xf32, #tpu.memory_space<smem>>
    %95 = vector.broadcast %94 : f32 to vector<1x128xf32>
    %96 = arith.mulf %18, %95 : vector<1x128xf32>
    %97 = arith.addf %93, %96 : vector<1x128xf32>
    %c22 = arith.constant 22 : index
    %98 = memref.load %arg1[%c22] : memref<64xf32, #tpu.memory_space<smem>>
    %99 = vector.broadcast %98 : f32 to vector<1x128xf32>
    %100 = arith.addf %97, %99 : vector<1x128xf32>
    %cst_11 = arith.constant 0.000000e+00 : f32
    %101 = vector.broadcast %cst_11 : f32 to vector<1x128xf32>
    %102 = arith.maximumf %100, %101 : vector<1x128xf32>
    %c24 = arith.constant 24 : index
    %103 = memref.load %arg1[%c24] : memref<64xf32, #tpu.memory_space<smem>>
    %104 = vector.broadcast %103 : f32 to vector<1x128xf32>
    %105 = arith.mulf %0, %104 : vector<1x128xf32>
    %c25 = arith.constant 25 : index
    %106 = memref.load %arg1[%c25] : memref<64xf32, #tpu.memory_space<smem>>
    %107 = vector.broadcast %106 : f32 to vector<1x128xf32>
    %108 = arith.mulf %1, %107 : vector<1x128xf32>
    %109 = arith.addf %105, %108 : vector<1x128xf32>
    %c26 = arith.constant 26 : index
    %110 = memref.load %arg1[%c26] : memref<64xf32, #tpu.memory_space<smem>>
    %111 = vector.broadcast %110 : f32 to vector<1x128xf32>
    %112 = arith.mulf %6, %111 : vector<1x128xf32>
    %113 = arith.addf %109, %112 : vector<1x128xf32>
    %c27 = arith.constant 27 : index
    %114 = memref.load %arg1[%c27] : memref<64xf32, #tpu.memory_space<smem>>
    %115 = vector.broadcast %114 : f32 to vector<1x128xf32>
    %116 = arith.mulf %10, %115 : vector<1x128xf32>
    %117 = arith.addf %113, %116 : vector<1x128xf32>
    %c28 = arith.constant 28 : index
    %118 = memref.load %arg1[%c28] : memref<64xf32, #tpu.memory_space<smem>>
    %119 = vector.broadcast %118 : f32 to vector<1x128xf32>
    %120 = arith.mulf %14, %119 : vector<1x128xf32>
    %121 = arith.addf %117, %120 : vector<1x128xf32>
    %c29 = arith.constant 29 : index
    %122 = memref.load %arg1[%c29] : memref<64xf32, #tpu.memory_space<smem>>
    %123 = vector.broadcast %122 : f32 to vector<1x128xf32>
    %124 = arith.mulf %18, %123 : vector<1x128xf32>
    %125 = arith.addf %121, %124 : vector<1x128xf32>
    %c30 = arith.constant 30 : index
    %126 = memref.load %arg1[%c30] : memref<64xf32, #tpu.memory_space<smem>>
    %127 = vector.broadcast %126 : f32 to vector<1x128xf32>
    %128 = arith.addf %125, %127 : vector<1x128xf32>
    %cst_12 = arith.constant 0.000000e+00 : f32
    %129 = vector.broadcast %cst_12 : f32 to vector<1x128xf32>
    %130 = arith.maximumf %128, %129 : vector<1x128xf32>
    %c32 = arith.constant 32 : index
    %131 = memref.load %arg1[%c32] : memref<64xf32, #tpu.memory_space<smem>>
    %132 = vector.broadcast %131 : f32 to vector<1x128xf32>
    %133 = arith.mulf %46, %132 : vector<1x128xf32>
    %c33 = arith.constant 33 : index
    %134 = memref.load %arg1[%c33] : memref<64xf32, #tpu.memory_space<smem>>
    %135 = vector.broadcast %134 : f32 to vector<1x128xf32>
    %136 = arith.mulf %74, %135 : vector<1x128xf32>
    %137 = arith.addf %133, %136 : vector<1x128xf32>
    %c34 = arith.constant 34 : index
    %138 = memref.load %arg1[%c34] : memref<64xf32, #tpu.memory_space<smem>>
    %139 = vector.broadcast %138 : f32 to vector<1x128xf32>
    %140 = arith.mulf %102, %139 : vector<1x128xf32>
    %141 = arith.addf %137, %140 : vector<1x128xf32>
    %c35 = arith.constant 35 : index
    %142 = memref.load %arg1[%c35] : memref<64xf32, #tpu.memory_space<smem>>
    %143 = vector.broadcast %142 : f32 to vector<1x128xf32>
    %144 = arith.mulf %130, %143 : vector<1x128xf32>
    %145 = arith.addf %141, %144 : vector<1x128xf32>
    %c0_13 = arith.constant 0 : index
    %c0_14 = arith.constant 0 : index
    %146 = vector.load %arg3[%c0_13, %c0_14] : memref<2x128xf32, #tpu.memory_space<vmem>>, vector<1x128xf32>
    tpu.vector_store %arg3[%c0_13, %c0_14], %145 {strides = array<i32>} : memref<2x128xf32, #tpu.memory_space<vmem>>, vector<1x128xf32>,
    %c40 = arith.constant 40 : index
    %147 = memref.load %arg1[%c40] : memref<64xf32, #tpu.memory_space<smem>>
    %148 = vector.broadcast %147 : f32 to vector<1x128xf32>
    %149 = arith.mulf %46, %148 : vector<1x128xf32>
    %c41 = arith.constant 41 : index
    %150 = memref.load %arg1[%c41] : memref<64xf32, #tpu.memory_space<smem>>
    %151 = vector.broadcast %150 : f32 to vector<1x128xf32>
    %152 = arith.mulf %74, %151 : vector<1x128xf32>
    %153 = arith.addf %149, %152 : vector<1x128xf32>
    %c42 = arith.constant 42 : index
    %154 = memref.load %arg1[%c42] : memref<64xf32, #tpu.memory_space<smem>>
    %155 = vector.broadcast %154 : f32 to vector<1x128xf32>
    %156 = arith.mulf %102, %155 : vector<1x128xf32>
    %157 = arith.addf %153, %156 : vector<1x128xf32>
    %c43 = arith.constant 43 : index
    %158 = memref.load %arg1[%c43] : memref<64xf32, #tpu.memory_space<smem>>
    %159 = vector.broadcast %158 : f32 to vector<1x128xf32>
    %160 = arith.mulf %130, %159 : vector<1x128xf32>
    %161 = arith.addf %157, %160 : vector<1x128xf32>
    %c1_15 = arith.constant 1 : index
    %c0_16 = arith.constant 0 : index
    %162 = vector.load %arg3[%c1_15, %c0_16] : memref<2x128xf32, #tpu.memory_space<vmem>>, vector<1x128xf32>
    tpu.vector_store %arg3[%c1_15, %c0_16], %161 {strides = array<i32>} : memref<2x128xf32, #tpu.memory_space<vmem>>, vector<1x128xf32>,
    return
  }
  func.func @transform_0(%arg0: i32) -> i32 {
    %c0_i32 = arith.constant 0 : i32
    %c0_i32_0 = arith.constant 0 : i32
    return %c0_i32 : i32
  }
  func.func @transform_1(%arg0: i32) -> (i32, i32) {
    %c0_i32 = arith.constant 0 : i32
    %c0_i32_0 = arith.constant 0 : i32
    return %c0_i32, %arg0 : i32, i32
  }
  func.func @transform_2(%arg0: i32) -> (i32, i32) {
    %c0_i32 = arith.constant 0 : i32
    %c0_i32_0 = arith.constant 0 : i32
    return %c0_i32, %arg0 : i32, i32
  }
}

</mosaic_0001>

<llo_original>
// kernel: tpu_custom_call.1
$region0: #{tpu_custom_call.1}
  #allocation0 [shape = 'u32[]', space=smem, size = 0x4, offset = 0x4, fixed_abs, tag = 'smem constant byte address 0x4 - core index']
  #allocation1 [shape = 'u32[144,128]{1,0:T(1,128)}', space=vmem, size = 0x12000, scoped, tag = 'internal scratch']
  %s0 = inlined_call_operand.hbm [shape: f32[64], index: 0, kind: input, shape index: {}]
  %s1 = inlined_call_operand.hbm [shape: f32[3,128], index: 1, kind: input, shape index: {}]
  %s2 = inlined_call_operand.hbm [shape: f32[2,128], index: 2, kind: output, shape index: {}]
  %s3 = sld [smem:[#allocation0]]
  $region26: #{tpu_custom_call.1} parent=0
    _
  %s5 = ssub.s32 1, %s3
  %s6 = scalar_select 0, %s5, %s3
  $region1: #{tpu_custom_call.1} parent=0
    #allocation2 [shape = 'u8[512]{0}', space=smem, size = 0x200, scoped, tag = 'input window, operand 0, single buffered']
    #allocation3 [shape = 's32[1]{0}', space=sflag, size = 0x4, scoped, tag = 'scoped memory for tpu_custom_call.1']
    #allocation4 [shape = 's32[1]{0}', space=sflag, size = 0x4, scoped, tag = 'scoped memory for tpu_custom_call.1']
    #allocation5 [shape = 's32[1]{0}', space=sflag, size = 0x4, scoped, tag = 'scoped memory for tpu_custom_call.1']
    #allocation6 [shape = 'u8[2048]{0}', space=vmem, size = 0x800, scoped, tag = 'input window, operand 1, single buffered']
    #allocation7 [shape = 'u8[1024]{0}', space=vmem, size = 0x400, scoped, tag = 'output window, operand 0, single buffered']
    %7 = vsyncpa [#allocation5], 0
    %8 = vsyncpa [#allocation3], 0
    %9 = vsyncpa [#allocation4], 0
    // Predicated region
    $region2: #{tpu_custom_call.1} parent=1 // pred_check
      _
    $region3: #{tpu_custom_call.1} parent=1 // pred_check_branch
      %11 = sbr.rel (0) target = $region5
    $region4: #{tpu_custom_call.1} parent=1 // pred_region
      %s13 = ssub.s32 16, 16
      %14 = vsyncadd [#allocation5], %s13
      %17 = dma.hbm_to_smem %s0, 16, [#allocation2], [#allocation5]
    $region5: #{tpu_custom_call.1} parent=1 // pred_fallthru
      _
    // Predicated region
    $region6: #{tpu_custom_call.1} parent=1 // pred_check
      _
    $region7: #{tpu_custom_call.1} parent=1 // pred_check_branch
      %19 = sbr.rel (0) target = $region9
    $region8: #{tpu_custom_call.1} parent=1 // pred_region
      %s21 = ssub.s32 64, 64
      %22 = vsyncadd [#allocation3], %s21
      %s24 = sshll.u32 [#allocation6], 4
      %s25 = int_to_ptr.vmem [resolvable:$true] %s24
      %27 = dma.hbm_to_vmem [thread:$0]  %s1, 64, %s25, [#allocation3]
    $region9: #{tpu_custom_call.1} parent=1 // pred_fallthru
      _
    // Predicated region
    $region10: #{tpu_custom_call.1} parent=1 // pred_check
      _
    $region11: #{tpu_custom_call.1} parent=1 // pred_check_branch
      %29 = sbr.rel (0) target = $region13
    $region12: #{tpu_custom_call.1} parent=1 // pred_region
      %30 = dma.done [#allocation5], 16
    $region13: #{tpu_custom_call.1} parent=1 // pred_fallthru
      _
    // Predicated region
    $region14: #{tpu_custom_call.1} parent=1 // pred_check
      _
    $region15: #{tpu_custom_call.1} parent=1 // pred_check_branch
      %32 = sbr.rel (0) target = $region17
    $region16: #{tpu_custom_call.1} parent=1 // pred_region
      %33 = dma.done [#allocation3], 64
    $region17: #{tpu_custom_call.1} parent=1 // pred_fallthru
      _
    %34 = sfence
    %v35 = vld [vmem:[#allocation6] sm:$0x1]
    %v36 = vld [vmem:[#allocation6 + $0x1] sm:$0x1]
    %v37 = vld [vmem:[#allocation6 + $0x2] sm:$0x1]
    %vm38 = vcmp.eq.f32.partialorder %v37, 0.0
    %v39 = vsel %vm38, 1, 0
    %v40 = vcvt.s32.f32 %v39
    %vm41 = vcmp.eq.f32.partialorder %v37, 1.0
    %v42 = vsel %vm41, 1, 0
    %v43 = vcvt.s32.f32 %v42
    %vm44 = vcmp.eq.f32.partialorder %v37, 2.0
    %v45 = vsel %vm44, 1, 0
    %v46 = vcvt.s32.f32 %v45
    %vm47 = vcmp.eq.f32.partialorder %v37, 3.0
    %v48 = vsel %vm47, 1, 0
    %v49 = vcvt.s32.f32 %v48
    %s50 = sld [smem:[#allocation2]]
    %v51 = vstv %s50
    %v52 = vmul.f32 %v35, %v51
    %s53 = sld [smem:[#allocation2 + $0x1]]
    %v54 = vstv %s53
    %v55 = vmul.f32 %v36, %v54
    %v56 = vadd.f32 %v52, %v55
    %s57 = sld [smem:[#allocation2 + $0x2]]
    %v58 = vstv %s57
    %v59 = vmul.f32 %v40, %v58
    %v60 = vadd.f32 %v56, %v59
    %s61 = sld [smem:[#allocation2 + $0x3]]
    %v62 = vstv %s61
    %v63 = vmul.f32 %v43, %v62
    %v64 = vadd.f32 %v60, %v63
    %s65 = sld [smem:[#allocation2 + $0x4]]
    %v66 = vstv %s65
    %v67 = vmul.f32 %v46, %v66
    %v68 = vadd.f32 %v64, %v67
    %s69 = sld [smem:[#allocation2 + $0x5]]
    %v70 = vstv %s69
    %v71 = vmul.f32 %v49, %v70
    %v72 = vadd.f32 %v68, %v71
    %s73 = sld [smem:[#allocation2 + $0x6]]
    %v74 = vstv %s73
    %v75 = vadd.f32 %v72, %v74
    %v76 = vmax.f32 %v75, 0.0
    %s77 = sld [smem:[#allocation2 + $0x8]]
    %v78 = vstv %s77
    %v79 = vmul.f32 %v35, %v78
    %s80 = sld [smem:[#allocation2 + $0x9]]
    %v81 = vstv %s80
    %v82 = vmul.f32 %v36, %v81
    %v83 = vadd.f32 %v79, %v82
    %s84 = sld [smem:[#allocation2 + $0xa]]
    %v85 = vstv %s84
    %v86 = vmul.f32 %v40, %v85
    %v87 = vadd.f32 %v83, %v86
    %s88 = sld [smem:[#allocation2 + $0xb]]
    %v89 = vstv %s88
    %v90 = vmul.f32 %v43, %v89
    %v91 = vadd.f32 %v87, %v90
    %s92 = sld [smem:[#allocation2 + $0xc]]
    %v93 = vstv %s92
    %v94 = vmul.f32 %v46, %v93
    %v95 = vadd.f32 %v91, %v94
    %s96 = sld [smem:[#allocation2 + $0xd]]
    %v97 = vstv %s96
    %v98 = vmul.f32 %v49, %v97
    %v99 = vadd.f32 %v95, %v98
    %s100 = sld [smem:[#allocation2 + $0xe]]
    %v101 = vstv %s100
    %v102 = vadd.f32 %v99, %v101
    %v103 = vmax.f32 %v102, 0.0
    %s104 = sld [smem:[#allocation2 + $0x10]]
    %v105 = vstv %s104
    %v106 = vmul.f32 %v35, %v105
    %s107 = sld [smem:[#allocation2 + $0x11]]
    %v108 = vstv %s107
    %v109 = vmul.f32 %v36, %v108
    %v110 = vadd.f32 %v106, %v109
    %s111 = sld [smem:[#allocation2 + $0x12]]
    %v112 = vstv %s111
    %v113 = vmul.f32 %v40, %v112
    %v114 = vadd.f32 %v110, %v113
    %s115 = sld [smem:[#allocation2 + $0x13]]
    %v116 = vstv %s115
    %v117 = vmul.f32 %v43, %v116
    %v118 = vadd.f32 %v114, %v117
    %s119 = sld [smem:[#allocation2 + $0x14]]
    %v120 = vstv %s119
    %v121 = vmul.f32 %v46, %v120
    %v122 = vadd.f32 %v118, %v121
    %s123 = sld [smem:[#allocation2 + $0x15]]
    %v124 = vstv %s123
    %v125 = vmul.f32 %v49, %v124
    %v126 = vadd.f32 %v122, %v125
    %s127 = sld [smem:[#allocation2 + $0x16]]
    %v128 = vstv %s127
    %v129 = vadd.f32 %v126, %v128
    %v130 = vmax.f32 %v129, 0.0
    %s131 = sld [smem:[#allocation2 + $0x18]]
    %v132 = vstv %s131
    %v133 = vmul.f32 %v35, %v132
    %s134 = sld [smem:[#allocation2 + $0x19]]
    %v135 = vstv %s134
    %v136 = vmul.f32 %v36, %v135
    %v137 = vadd.f32 %v133, %v136
    %s138 = sld [smem:[#allocation2 + $0x1a]]
    %v139 = vstv %s138
    %v140 = vmul.f32 %v40, %v139
    %v141 = vadd.f32 %v137, %v140
    %s142 = sld [smem:[#allocation2 + $0x1b]]
    %v143 = vstv %s142
    %v144 = vmul.f32 %v43, %v143
    %v145 = vadd.f32 %v141, %v144
    %s146 = sld [smem:[#allocation2 + $0x1c]]
    %v147 = vstv %s146
    %v148 = vmul.f32 %v46, %v147
    %v149 = vadd.f32 %v145, %v148
    %s150 = sld [smem:[#allocation2 + $0x1d]]
    %v151 = vstv %s150
    %v152 = vmul.f32 %v49, %v151
    %v153 = vadd.f32 %v149, %v152
    %s154 = sld [smem:[#allocation2 + $0x1e]]
    %v155 = vstv %s154
    %v156 = vadd.f32 %v153, %v155
    %v157 = vmax.f32 %v156, 0.0
    %s158 = sld [smem:[#allocation2 + $0x20]]
    %v159 = vstv %s158
    %v160 = vmul.f32 %v76, %v159
    %s161 = sld [smem:[#allocation2 + $0x21]]
    %v162 = vstv %s161
    %v163 = vmul.f32 %v103, %v162
    %v164 = vadd.f32 %v160, %v163
    %s165 = sld [smem:[#allocation2 + $0x22]]
    %v166 = vstv %s165
    %v167 = vmul.f32 %v130, %v166
    %v168 = vadd.f32 %v164, %v167
    %s169 = sld [smem:[#allocation2 + $0x23]]
    %v170 = vstv %s169
    %v171 = vmul.f32 %v157, %v170
    %v172 = vadd.f32 %v168, %v171
    %173 = vst [vmem:[#allocation7] sm:$0x1] %v172
    %s174 = sld [smem:[#allocation2 + $0x28]]
    %v175 = vstv %s174
    %v176 = vmul.f32 %v76, %v175
    %s177 = sld [smem:[#allocation2 + $0x29]]
    %v178 = vstv %s177
    %v179 = vmul.f32 %v103, %v178
    %v180 = vadd.f32 %v176, %v179
    %s181 = sld [smem:[#allocation2 + $0x2a]]
    %v182 = vstv %s181
    %v183 = vmul.f32 %v130, %v182
    %v184 = vadd.f32 %v180, %v183
    %s185 = sld [smem:[#allocation2 + $0x2b]]
    %v186 = vstv %s185
    %v187 = vmul.f32 %v157, %v186
    %v188 = vadd.f32 %v184, %v187
    %189 = vst [vmem:[#allocation7 + $0x1] sm:$0x1] %v188
    // Predicated region
    $region18: #{tpu_custom_call.1} parent=1 // pred_check
      _
    $region19: #{tpu_custom_call.1} parent=1 // pred_check_branch
      %191 = sbr.rel (0) target = $region21
    $region20: #{tpu_custom_call.1} parent=1 // pred_region
      %s193 = ssub.s32 32, 32
      %194 = vsyncadd [#allocation4], %s193
      %s196 = sshll.u32 [#allocation7], 4
      %s197 = int_to_ptr.vmem [resolvable:$true] %s196
      %199 = dma.vmem_to_hbm [thread:$0]  %s197, 32, %s2, [#allocation4]
    $region21: #{tpu_custom_call.1} parent=1 // pred_fallthru
      _
    // Predicated region
    $region22: #{tpu_custom_call.1} parent=1 // pred_check
      _
    $region23: #{tpu_custom_call.1} parent=1 // pred_check_branch
      %201 = sbr.rel (0) target = $region25
    $region24: #{tpu_custom_call.1} parent=1 // pred_region
      %202 = dma.done [#allocation4], 32
    $region25: #{tpu_custom_call.1} parent=1 // pred_fallthru
      _
    %203 = vsyncpa [#allocation3], 1
    %204 = vsyncpa [#allocation4], 1
    %205 = vsyncpa [#allocation5], 1

</llo_original>
